<compile_context>
chip_gen: v7x
topology: tpu7x:2x2x1
jax: 0.10.0
libtpu: 0.0.40
codegen_flags: <defaults>
</compile_context>

<pallas_src>
import jax
import jax.numpy as jnp
from jax.experimental import pallas as pl
from jax.experimental.pallas import tpu as pltpu

IN_DIM = 28 * 28        # 784
HID = 256
OUT_DIM = 1
NEG_SLOPE = 0.01        # nn.LeakyReLU() default negative_slope
TB_DEFAULT = 2048       # batch tile (review baseline)
MIN_SPLIT = 256         # only split a 1-step grid if each half gets >=128 rows
VMEM_LIMIT_DEFAULT = 48 * 1024 * 1024


def _leaky_relu(x):
    # For slope < 1, max(x, slope*x) == LeakyReLU(x); 2 VPU ops per vreg.
    return jnp.maximum(x, NEG_SLOPE * x)


def _round_up(x, m):
    return (x + m - 1) // m * m


def _cdiv(a, b):
    return (a + b - 1) // b


def discriminator_kernel(x_ref, w1_ref, b1_ref, w2_ref, b2_ref, w3_ref, b3_ref,
                         o_ref):
    # x tile arrives as f32 straight from HBM; cast to bf16 on the VPU here so
    # the wrapper never makes a separate HBM pass for the convert.
    x = x_ref[...].astype(jnp.bfloat16)                                # [TB, 784]
    h1 = jnp.dot(x, w1_ref[...], preferred_element_type=jnp.float32)   # MXU
    h1 = _leaky_relu(h1 + b1_ref[...])                                 # [TB, 256] f32
    h2 = jnp.dot(h1.astype(jnp.bfloat16), w2_ref[...],
                 preferred_element_type=jnp.float32)                   # MXU
    h2 = _leaky_relu(h2 + b2_ref[...])                                 # [TB, 256] f32
    # fc3 has N=1: VPU multiply + lane reduction against the [1, 256] w3 row
    # instead of wasting a full MXU pass on a single output column.
    scores = jnp.sum(h2 * w3_ref[...], axis=-1) + b3_ref[0, 0]         # [TB] f32
    # Lane-dense store: the output block is a [1, TB] row (the small
    # sublane->lane relayout is XLU work hidden under the x DMA).
    o_ref[...] = scores[None, :].astype(o_ref.dtype)


def discriminator_forward(x_nchw, params, *, tb=TB_DEFAULT,
                          vmem_limit_bytes=VMEM_LIMIT_DEFAULT):
    """x_nchw: [B, 1, 28, 28] float32 -> scores [B, 1] float32."""
    B = x_nchw.shape[0]
    x_flat = x_nchw.reshape(B, -1)                  # [B, 784]; free metadata reshape

    # Batch tile: as large as possible (amortizes ~0.35us/step overhead) but no
    # larger than the sublane-rounded batch.  No padding of x is materialized.
    tb = min(tb, _round_up(B, 16))
    num_tiles = _cdiv(B, tb)
    # v7x megacore: a 1-step grid leaves one TensorCore idle; if the batch is
    # worth splitting, halve the tile so the grid has 2 "parallel" steps.
    if num_tiles == 1 and B > MIN_SPLIT:
        tb = _round_up(_cdiv(B, 2), 16)
        num_tiles = _cdiv(B, tb)

    w1, b1, w2, b2, w3, b3 = params
    w1_bf = w1.astype(jnp.bfloat16)                      # [784, 256]
    w2_bf = w2.astype(jnp.bfloat16)                      # [256, 256]
    w3_row = w3.reshape(1, HID).astype(jnp.float32)      # [1, 256] (VPU path, f32)
    b3_s = b3.reshape(1, 1).astype(jnp.float32)          # SMEM scalar

    out = pl.pallas_call(
        discriminator_kernel,
        out_shape=jax.ShapeDtypeStruct((num_tiles, tb), jnp.float32),
        grid=(num_tiles,),
        in_specs=[
            pl.BlockSpec((tb, IN_DIM), lambda i: (i, 0)),        # x tile [TB, 784] f32
            pl.BlockSpec((IN_DIM, HID), lambda i: (0, 0)),       # w1 [784, 256] bf16
            pl.BlockSpec((1, HID), lambda i: (0, 0)),            # b1 [1, 256] f32
            pl.BlockSpec((HID, HID), lambda i: (0, 0)),          # w2 [256, 256] bf16
            pl.BlockSpec((1, HID), lambda i: (0, 0)),            # b2 [1, 256] f32
            pl.BlockSpec((1, HID), lambda i: (0, 0)),            # w3 row [1, 256] f32
            pl.BlockSpec(memory_space=pltpu.MemorySpace.SMEM),   # b3 scalar [1, 1]
        ],
        out_specs=pl.BlockSpec((1, tb), lambda i: (i, 0)),       # lane-dense scores
        compiler_params=pltpu.CompilerParams(
            dimension_semantics=("parallel",),
            vmem_limit_bytes=vmem_limit_bytes,
        ),
    )(x_flat, w1_bf, b1, w2_bf, b2, w3_row, b3_s)

    # [num_tiles, tb] -> [B, 1]; rows >= B (ragged last tile) are dropped.
    return out.reshape(num_tiles * tb)[:B].reshape(B, OUT_DIM)


def init_params(key):
    """Deterministic init mimicking nn.Linear's U(-1/sqrt(fan_in), 1/sqrt(fan_in))."""
    ks = jax.random.split(key, 6)

    def linear(kw, kb, fan_in, fan_out):
        bound = 1.0 / jnp.sqrt(jnp.float32(fan_in))
        w = jax.random.uniform(kw, (fan_in, fan_out), jnp.float32, -bound, bound)
        b = jax.random.uniform(kb, (1, fan_out), jnp.float32, -bound, bound)
        return w, b

    w1, b1 = linear(ks[0], ks[1], IN_DIM, HID)
    w2, b2 = linear(ks[2], ks[3], HID, HID)
    w3, b3 = linear(ks[4], ks[5], HID, OUT_DIM)
    return (w1, b1, w2, b2, w3, b3)


def reference_forward(x_nchw, params):
    """Pure-JAX reference with the same bf16-operand / f32-accumulate recipe."""
    w1, b1, w2, b2, w3, b3 = params
    x = x_nchw.reshape(x_nchw.shape[0], -1).astype(jnp.bfloat16)
    h1 = jnp.dot(x, w1.astype(jnp.bfloat16), preferred_element_type=jnp.float32)
    h1 = _leaky_relu(h1 + b1)
    h2 = jnp.dot(h1.astype(jnp.bfloat16), w2.astype(jnp.bfloat16),
                 preferred_element_type=jnp.float32)
    h2 = _leaky_relu(h2 + b2)
    return jnp.sum(h2 * w3.reshape(1, HID), axis=-1, keepdims=True) + b3


# TODO(synk): discriminator.loss() (BCE helper) is training-time code outside
# forward(); it is not implemented as a Pallas kernel.

if __name__ == "__main__":
    key = jax.random.PRNGKey(0)
    k_params, k_x = jax.random.split(key)

    params = init_params(k_params)
    # Small batch of MNIST-shaped inputs, NCHW like PyTorch.
    x = jax.random.normal(k_x, (8, 1, 28, 28), jnp.float32)

    scores = discriminator_forward(x, params)
    scores = jax.block_until_ready(scores)

    ref = reference_forward(x, params)
    assert scores.shape == (8, 1), scores.shape
    assert jnp.allclose(scores, ref, atol=1e-2, rtol=1e-2), (
        "mismatch vs pure-JAX reference")

    print("KERNEL_OK")
</pallas_src>

<mosaic_0001>
module attributes {stable_mosaic.version = 11 : i64} {
  func.func @discriminator_kernel(%arg0: i32, %arg1: memref<16x784xf32, #tpu.memory_space<vmem>>, %arg2: memref<784x256xbf16, #tpu.memory_space<vmem>>, %arg3: memref<1x256xf32, #tpu.memory_space<vmem>>, %arg4: memref<256x256xbf16, #tpu.memory_space<vmem>>, %arg5: memref<1x256xf32, #tpu.memory_space<vmem>>, %arg6: memref<1x256xf32, #tpu.memory_space<vmem>>, %arg7: memref<1x1xf32, #tpu.memory_space<smem>>, %arg8: memref<1x16xf32, #tpu.memory_space<vmem>>) attributes {dimension_semantics = [#tpu.dimension_semantics<parallel>], iteration_bounds = array<i64: 1>, scalar_prefetch = 0 : i64, scratch_operands = 0 : i64, tpu.core_type = #tpu.core_type<tc>, window_params = [{transform_indices = @transform_0, window_bounds = array<i64: 16, 784>}, {pipeline_mode = #tpu.pipeline_mode<synchronous>, transform_indices = @transform_1, window_bounds = array<i64: 784, 256>}, {pipeline_mode = #tpu.pipeline_mode<synchronous>, transform_indices = @transform_2, window_bounds = array<i64: 1, 256>}, {pipeline_mode = #tpu.pipeline_mode<synchronous>, transform_indices = @transform_3, window_bounds = array<i64: 256, 256>}, {pipeline_mode = #tpu.pipeline_mode<synchronous>, transform_indices = @transform_4, window_bounds = array<i64: 1, 256>}, {pipeline_mode = #tpu.pipeline_mode<synchronous>, transform_indices = @transform_5, window_bounds = array<i64: 1, 256>}, {transform_indices = @transform_6, window_bounds = array<i64: 1, 1>}, {transform_indices = @transform_7, window_bounds = array<i64: 1, 16>}]} {
    %c0 = arith.constant 0 : index
    %c0_0 = arith.constant 0 : index
    %0 = vector.load %arg1[%c0, %c0_0] : memref<16x784xf32, #tpu.memory_space<vmem>>, vector<16x784xf32>
    %1 = arith.truncf %0 : vector<16x784xf32> to vector<16x784xbf16>
    %c0_1 = arith.constant 0 : index
    %c0_2 = arith.constant 0 : index
    %2 = vector.load %arg2[%c0_1, %c0_2] : memref<784x256xbf16, #tpu.memory_space<vmem>>, vector<784x256xbf16>
    %cst = arith.constant dense<0.000000e+00> : vector<16x256xf32>
    %3 = tpu.matmul %1, %2, %cst {dimension_numbers = #tpu.dot_dimension_numbers<[1], [0], [0], [1], [0, 0, 1, 1], [], []>} : vector<16x784xbf16>, vector<784x256xbf16>, vector<16x256xf32> -> vector<16x256xf32>
    %c0_3 = arith.constant 0 : index
    %c0_4 = arith.constant 0 : index
    %4 = vector.load %arg3[%c0_3, %c0_4] : memref<1x256xf32, #tpu.memory_space<vmem>>, vector<1x256xf32>
    %5 = vector.broadcast %4 : vector<1x256xf32> to vector<16x256xf32>
    %6 = arith.addf %3, %5 : vector<16x256xf32>
    %cst_5 = arith.constant 0.00999999977 : f32
    %7 = vector.broadcast %cst_5 : f32 to vector<16x256xf32>
    %8 = arith.mulf %7, %6 : vector<16x256xf32>
    %9 = arith.maximumf %6, %8 : vector<16x256xf32>
    %10 = arith.truncf %9 : vector<16x256xf32> to vector<16x256xbf16>
    %c0_6 = arith.constant 0 : index
    %c0_7 = arith.constant 0 : index
    %11 = vector.load %arg4[%c0_6, %c0_7] : memref<256x256xbf16, #tpu.memory_space<vmem>>, vector<256x256xbf16>
    %cst_8 = arith.constant dense<0.000000e+00> : vector<16x256xf32>
    %12 = tpu.matmul %10, %11, %cst_8 {dimension_numbers = #tpu.dot_dimension_numbers<[1], [0], [0], [1], [0, 0, 1, 1], [], []>} : vector<16x256xbf16>, vector<256x256xbf16>, vector<16x256xf32> -> vector<16x256xf32>
    %c0_9 = arith.constant 0 : index
    %c0_10 = arith.constant 0 : index
    %13 = vector.load %arg5[%c0_9, %c0_10] : memref<1x256xf32, #tpu.memory_space<vmem>>, vector<1x256xf32>
    %14 = vector.broadcast %13 : vector<1x256xf32> to vector<16x256xf32>
    %15 = arith.addf %12, %14 : vector<16x256xf32>
    %cst_11 = arith.constant 0.00999999977 : f32
    %16 = vector.broadcast %cst_11 : f32 to vector<16x256xf32>
    %17 = arith.mulf %16, %15 : vector<16x256xf32>
    %18 = arith.maximumf %15, %17 : vector<16x256xf32>
    %c0_12 = arith.constant 0 : index
    %c0_13 = arith.constant 0 : index
    %19 = vector.load %arg6[%c0_12, %c0_13] : memref<1x256xf32, #tpu.memory_space<vmem>>, vector<1x256xf32>
    %20 = vector.broadcast %19 : vector<1x256xf32> to vector<16x256xf32>
    %21 = arith.mulf %18, %20 : vector<16x256xf32>
    %cst_14 = arith.constant dense<0.000000e+00> : vector<16xf32>
    %22 = vector.multi_reduction <add>, %21, %cst_14 [1] : vector<16x256xf32> to vector<16xf32>
    %c0_15 = arith.constant 0 : index
    %c0_16 = arith.constant 0 : index
    %23 = memref.load %arg7[%c0_15, %c0_16] : memref<1x1xf32, #tpu.memory_space<smem>>
    %24 = vector.broadcast %23 : f32 to vector<16xf32>
    %25 = arith.addf %22, %24 : vector<16xf32>
    %26 = vector.shape_cast %25 : vector<16xf32> to vector<1x16xf32>
    %c0_17 = arith.constant 0 : index
    %c0_18 = arith.constant 0 : index
    %27 = vector.load %arg8[%c0_17, %c0_18] : memref<1x16xf32, #tpu.memory_space<vmem>>, vector<1x16xf32>
    tpu.vector_store %arg8[%c0_17, %c0_18], %26 {strides = array<i32>} : memref<1x16xf32, #tpu.memory_space<vmem>>, vector<1x16xf32>,
    return
  }
  func.func @transform_0(%arg0: i32) -> (i32, i32) {
    %c0_i32 = arith.constant 0 : i32
    %c0_i32_0 = arith.constant 0 : i32
    return %arg0, %c0_i32 : i32, i32
  }
  func.func @transform_1(%arg0: i32) -> (i32, i32) {
    %c0_i32 = arith.constant 0 : i32
    %c0_i32_0 = arith.constant 0 : i32
    %c0_i32_1 = arith.constant 0 : i32
    return %c0_i32, %c0_i32_0 : i32, i32
  }
  func.func @transform_2(%arg0: i32) -> (i32, i32) {
    %c0_i32 = arith.constant 0 : i32
    %c0_i32_0 = arith.constant 0 : i32
    %c0_i32_1 = arith.constant 0 : i32
    return %c0_i32, %c0_i32_0 : i32, i32
  }
  func.func @transform_3(%arg0: i32) -> (i32, i32) {
    %c0_i32 = arith.constant 0 : i32
    %c0_i32_0 = arith.constant 0 : i32
    %c0_i32_1 = arith.constant 0 : i32
    return %c0_i32, %c0_i32_0 : i32, i32
  }
  func.func @transform_4(%arg0: i32) -> (i32, i32) {
    %c0_i32 = arith.constant 0 : i32
    %c0_i32_0 = arith.constant 0 : i32
    %c0_i32_1 = arith.constant 0 : i32
    return %c0_i32, %c0_i32_0 : i32, i32
  }
  func.func @transform_5(%arg0: i32) -> (i32, i32) {
    %c0_i32 = arith.constant 0 : i32
    %c0_i32_0 = arith.constant 0 : i32
    %c0_i32_1 = arith.constant 0 : i32
    return %c0_i32, %c0_i32_0 : i32, i32
  }
  func.func @transform_6(%arg0: i32) -> (i32, i32) {
    %c0_i32 = arith.constant 0 : i32
    %c0_i32_0 = arith.constant 0 : i32
    %c0_i32_1 = arith.constant 0 : i32
    return %c0_i32, %c0_i32_0 : i32, i32
  }
  func.func @transform_7(%arg0: i32) -> (i32, i32) {
    %c0_i32 = arith.constant 0 : i32
    %c0_i32_0 = arith.constant 0 : i32
    return %arg0, %c0_i32 : i32, i32
  }
}

</mosaic_0001>

<llo_original>
// kernel: tpu_custom_call.1
$region0: #{tpu_custom_call.1}
  #allocation0 [shape = 'u32[]', space=smem, size = 0x4, offset = 0x4, fixed_abs, tag = 'smem constant byte address 0x4 - core index']
  #allocation1 [shape = 'u32[144,128]{1,0:T(1,128)}', space=vmem, size = 0x12000, scoped, tag = 'internal scratch']
  #allocation2 [shape = 'f32[1,1]{1,0:T(1,128)S(6)}', space=smem, size = 0x200, scoped, tag = 'scoped memory for tpu_custom_call.1']
  %s0 = inlined_call_operand.hbm [shape: f32[8,784], index: 0, kind: input, shape index: {}]
  %s1 = inlined_call_operand.hbm [shape: bf16[784,256], index: 1, kind: input, shape index: {}]
  %s2 = inlined_call_operand.vmem [shape: f32[1,256], index: 2, kind: input, shape index: {}]
  %s3 = inlined_call_operand.hbm [shape: bf16[256,256], index: 3, kind: input, shape index: {}]
  %s4 = inlined_call_operand.vmem [shape: f32[1,256], index: 4, kind: input, shape index: {}]
  %s5 = inlined_call_operand.vmem [shape: f32[1,256], index: 5, kind: input, shape index: {}]
  %s6 = inlined_call_operand.<no memory space> [shape: f32[1,1], index: 6, kind: input, shape index: {}]
  %s7 = inlined_call_operand.hbm [shape: f32[1,16], index: 7, kind: output, shape index: {}]
  %s8 = sld [smem:[#allocation0]]
  $region50: #{tpu_custom_call.1} parent=0
    _
  %s10 = ssub.s32 1, %s8
  %s11 = scalar_select 0, %s10, %s8
  %12 = sst [smem:[#allocation2]] %s6
  $region1: #{tpu_custom_call.1} parent=0
    #allocation3 [shape = 'u8[57344]{0}', space=vmem, size = 0xe000, scoped, tag = 'input window, operand 0, single buffered']
    #allocation4 [shape = 's32[1]{0}', space=sflag, size = 0x4, scoped, tag = 'scoped memory for tpu_custom_call.1']
    #allocation5 [shape = 's32[1]{0}', space=sflag, size = 0x4, scoped, tag = 'scoped memory for tpu_custom_call.1']
    #allocation6 [shape = 'u8[401408]{0}', space=vmem, size = 0x62000, scoped, tag = 'input window, operand 1, single buffered']
    #allocation7 [shape = 's32[1]{0}', space=sflag, size = 0x4, scoped, tag = 'scoped memory for tpu_custom_call.1']
    #allocation8 [shape = 'u8[131072]{0}', space=vmem, size = 0x20000, scoped, tag = 'input window, operand 3, single buffered']
    #allocation9 [shape = 'u8[512]{0}', space=vmem, size = 0x400, scoped, tag = 'output window, operand 0, single buffered']
    %13 = vsyncpa [#allocation4], 0
    %14 = vsyncpa [#allocation7], 0
    %15 = vsyncpa [#allocation5], 0
    // Predicated region
    $region2: #{tpu_custom_call.1} parent=1 // pred_check
      _
    $region3: #{tpu_custom_call.1} parent=1 // pred_check_branch
      %17 = sbr.rel (0) target = $region5
    $region4: #{tpu_custom_call.1} parent=1 // pred_region
      %s19 = ssub.s32 1792, 896
      %20 = vsyncadd [#allocation4], %s19
      %s21 = sshll.u32 [#allocation3], 4
      %s22 = int_to_ptr.vmem [resolvable:$true] %s21
      %27 = dma.hbm_to_vmem [thread:$0]  %s0, 896, %s22, [#allocation4], 896, 896, 56
    $region5: #{tpu_custom_call.1} parent=1 // pred_fallthru
      _
    // Predicated region
    $region6: #{tpu_custom_call.1} parent=1 // pred_check
      _
    $region7: #{tpu_custom_call.1} parent=1 // pred_check_branch
      %29 = sbr.rel (0) target = $region9
    $region8: #{tpu_custom_call.1} parent=1 // pred_region
      %s31 = ssub.s32 12544, 12544
      %32 = vsyncadd [#allocation7], %s31
      %s33 = sshll.u32 [#allocation6], 4
      %s34 = int_to_ptr.vmem [resolvable:$true] %s33
      %39 = dma.hbm_to_vmem [thread:$0]  %s1, 12544, %s34, [#allocation7], 128, 128, 8
    $region9: #{tpu_custom_call.1} parent=1 // pred_fallthru
      _
    // Predicated region
    $region10: #{tpu_custom_call.1} parent=1 // pred_check
      _
    $region11: #{tpu_custom_call.1} parent=1 // pred_check_branch
      %41 = sbr.rel (0) target = $region13
    $region12: #{tpu_custom_call.1} parent=1 // pred_region
      _
    $region13: #{tpu_custom_call.1} parent=1 // pred_fallthru
      _
    // Predicated region
    $region14: #{tpu_custom_call.1} parent=1 // pred_check
      _
    $region15: #{tpu_custom_call.1} parent=1 // pred_check_branch
      %43 = sbr.rel (0) target = $region17
    $region16: #{tpu_custom_call.1} parent=1 // pred_region
      %s45 = ssub.s32 4096, 4096
      %46 = vsyncadd [#allocation7], %s45
      %s47 = sshll.u32 [#allocation8], 4
      %s48 = int_to_ptr.vmem [resolvable:$true] %s47
      %53 = dma.hbm_to_vmem [thread:$0]  %s3, 4096, %s48, [#allocation7], 128, 128, 8
    $region17: #{tpu_custom_call.1} parent=1 // pred_fallthru
      _
    // Predicated region
    $region18: #{tpu_custom_call.1} parent=1 // pred_check
      _
    $region19: #{tpu_custom_call.1} parent=1 // pred_check_branch
      %55 = sbr.rel (0) target = $region21
    $region20: #{tpu_custom_call.1} parent=1 // pred_region
      _
    $region21: #{tpu_custom_call.1} parent=1 // pred_fallthru
      _
    // Predicated region
    $region22: #{tpu_custom_call.1} parent=1 // pred_check
      _
    $region23: #{tpu_custom_call.1} parent=1 // pred_check_branch
      %57 = sbr.rel (0) target = $region25
    $region24: #{tpu_custom_call.1} parent=1 // pred_region
      _
    $region25: #{tpu_custom_call.1} parent=1 // pred_fallthru
      _
    // Predicated region
    $region26: #{tpu_custom_call.1} parent=1 // pred_check
      _
    $region27: #{tpu_custom_call.1} parent=1 // pred_check_branch
      %59 = sbr.rel (0) target = $region29
    $region28: #{tpu_custom_call.1} parent=1 // pred_region
      _
    $region29: #{tpu_custom_call.1} parent=1 // pred_fallthru
      _
    // Predicated region
    $region30: #{tpu_custom_call.1} parent=1 // pred_check
      _
    $region31: #{tpu_custom_call.1} parent=1 // pred_check_branch
      %61 = sbr.rel (0) target = $region33
    $region32: #{tpu_custom_call.1} parent=1 // pred_region
      %62 = dma.done [#allocation4], 1792
    $region33: #{tpu_custom_call.1} parent=1 // pred_fallthru
      _
    // Predicated region
    $region34: #{tpu_custom_call.1} parent=1 // pred_check
      _
    $region35: #{tpu_custom_call.1} parent=1 // pred_check_branch
      %64 = sbr.rel (0) target = $region37
    $region36: #{tpu_custom_call.1} parent=1 // pred_region
      %65 = dma.done [#allocation7], 12544
    $region37: #{tpu_custom_call.1} parent=1 // pred_fallthru
      _
    // Predicated region
    $region38: #{tpu_custom_call.1} parent=1 // pred_check
      _
    $region39: #{tpu_custom_call.1} parent=1 // pred_check_branch
      %67 = sbr.rel (0) target = $region41
    $region40: #{tpu_custom_call.1} parent=1 // pred_region
      %68 = dma.done [#allocation7], 4096
    $region41: #{tpu_custom_call.1} parent=1 // pred_fallthru
      _
    %v70 = vld [vmem:[#allocation3] sm:$0xff]
    %v71 = vld [vmem:[#allocation3 + $0x8] sm:$0xff]
    %v72 = vld [vmem:[#allocation3 + $0x10] sm:$0xff]
    %v73 = vld [vmem:[#allocation3 + $0x18] sm:$0xff]
    %v74 = vld [vmem:[#allocation3 + $0x20] sm:$0xff]
    %v75 = vld [vmem:[#allocation3 + $0x28] sm:$0xff]
    %v76 = vld [vmem:[#allocation3 + $0x30] sm:$0xff]
    %v77 = vld [vmem:[#allocation3 + $0x38] sm:$0xff]
    %v78 = vld [vmem:[#allocation3 + $0x40] sm:$0xff]
    %v79 = vld [vmem:[#allocation3 + $0x48] sm:$0xff]
    %v80 = vld [vmem:[#allocation3 + $0x50] sm:$0xff]
    %v81 = vld [vmem:[#allocation3 + $0x58] sm:$0xff]
    %v82 = vld [vmem:[#allocation3 + $0x60] sm:$0xff]
    %v83 = vld [vmem:[#allocation3 + $0x68] sm:$0xff]
    %v84 = vpack.c.bf16 %v77, %v70
    %v85 = vpack.c.bf16 %v78, %v71
    %v86 = vpack.c.bf16 %v79, %v72
    %v87 = vpack.c.bf16 %v80, %v73
    %v88 = vpack.c.bf16 %v81, %v74
    %v89 = vpack.c.bf16 %v82, %v75
    %v90 = vpack.c.bf16 %v83, %v76
    %v91 = vld [vmem:[#allocation6] sm:$0xff]
    %v92 = vld [vmem:[#allocation6 + $0x8] sm:$0xff]
    %v93 = vld [vmem:[#allocation6 + $0x10] sm:$0xff]
    %v94 = vld [vmem:[#allocation6 + $0x18] sm:$0xff]
    %v95 = vld [vmem:[#allocation6 + $0x20] sm:$0xff]
    %v96 = vld [vmem:[#allocation6 + $0x28] sm:$0xff]
    %v97 = vld [vmem:[#allocation6 + $0x30] sm:$0xff]
    %v98 = vld [vmem:[#allocation6 + $0x38] sm:$0xff]
    %v99 = vld [vmem:[#allocation6 + $0x40] sm:$0xff]
    %v100 = vld [vmem:[#allocation6 + $0x48] sm:$0xff]
    %v101 = vld [vmem:[#allocation6 + $0x50] sm:$0xff]
    %v102 = vld [vmem:[#allocation6 + $0x58] sm:$0xff]
    %v103 = vld [vmem:[#allocation6 + $0x60] sm:$0xff]
    %v104 = vld [vmem:[#allocation6 + $0x68] sm:$0xff]
    %v105 = vld [vmem:[#allocation6 + $0x70] sm:$0xff]
    %v106 = vld [vmem:[#allocation6 + $0x78] sm:$0xff]
    %v107 = vld [vmem:[#allocation6 + $0x80] sm:$0xff]
    %v108 = vld [vmem:[#allocation6 + $0x88] sm:$0xff]
    %v109 = vld [vmem:[#allocation6 + $0x90] sm:$0xff]
    %v110 = vld [vmem:[#allocation6 + $0x98] sm:$0xff]
    %v111 = vld [vmem:[#allocation6 + $0xa0] sm:$0xff]
    %v112 = vld [vmem:[#allocation6 + $0xa8] sm:$0xff]
    %v113 = vld [vmem:[#allocation6 + $0xb0] sm:$0xff]
    %v114 = vld [vmem:[#allocation6 + $0xb8] sm:$0xff]
    %v115 = vld [vmem:[#allocation6 + $0xc0] sm:$0xff]
    %v116 = vld [vmem:[#allocation6 + $0xc8] sm:$0xff]
    %v117 = vld [vmem:[#allocation6 + $0xd0] sm:$0xff]
    %v118 = vld [vmem:[#allocation6 + $0xd8] sm:$0xff]
    %v119 = vld [vmem:[#allocation6 + $0xe0] sm:$0xff]
    %v120 = vld [vmem:[#allocation6 + $0xe8] sm:$0xff]
    %v121 = vld [vmem:[#allocation6 + $0xf0] sm:$0xff]
    %v122 = vld [vmem:[#allocation6 + $0xf8] sm:$0xff]
    %v123 = vld [vmem:[#allocation6 + $0x100] sm:$0xff]
    %v124 = vld [vmem:[#allocation6 + $0x108] sm:$0xff]
    %v125 = vld [vmem:[#allocation6 + $0x110] sm:$0xff]
    %v126 = vld [vmem:[#allocation6 + $0x118] sm:$0xff]
    %v127 = vld [vmem:[#allocation6 + $0x120] sm:$0xff]
    %v128 = vld [vmem:[#allocation6 + $0x128] sm:$0xff]
    %v129 = vld [vmem:[#allocation6 + $0x130] sm:$0xff]
    %v130 = vld [vmem:[#allocation6 + $0x138] sm:$0xff]
    %v131 = vld [vmem:[#allocation6 + $0x140] sm:$0xff]
    %v132 = vld [vmem:[#allocation6 + $0x148] sm:$0xff]
    %v133 = vld [vmem:[#allocation6 + $0x150] sm:$0xff]
    %v134 = vld [vmem:[#allocation6 + $0x158] sm:$0xff]
    %v135 = vld [vmem:[#allocation6 + $0x160] sm:$0xff]
    %v136 = vld [vmem:[#allocation6 + $0x168] sm:$0xff]
    %v137 = vld [vmem:[#allocation6 + $0x170] sm:$0xff]
    %v138 = vld [vmem:[#allocation6 + $0x178] sm:$0xff]
    %v139 = vld [vmem:[#allocation6 + $0x180] sm:$0xff]
    %v140 = vld [vmem:[#allocation6 + $0x188] sm:$0xff]
    %v141 = vld [vmem:[#allocation6 + $0x190] sm:$0xff]
    %v142 = vld [vmem:[#allocation6 + $0x198] sm:$0xff]
    %v143 = vld [vmem:[#allocation6 + $0x1a0] sm:$0xff]
    %v144 = vld [vmem:[#allocation6 + $0x1a8] sm:$0xff]
    %v145 = vld [vmem:[#allocation6 + $0x1b0] sm:$0xff]
    %v146 = vld [vmem:[#allocation6 + $0x1b8] sm:$0xff]
    %v147 = vld [vmem:[#allocation6 + $0x1c0] sm:$0xff]
    %v148 = vld [vmem:[#allocation6 + $0x1c8] sm:$0xff]
    %v149 = vld [vmem:[#allocation6 + $0x1d0] sm:$0xff]
    %v150 = vld [vmem:[#allocation6 + $0x1d8] sm:$0xff]
    %v151 = vld [vmem:[#allocation6 + $0x1e0] sm:$0xff]
    %v152 = vld [vmem:[#allocation6 + $0x1e8] sm:$0xff]
    %v153 = vld [vmem:[#allocation6 + $0x1f0] sm:$0xff]
    %v154 = vld [vmem:[#allocation6 + $0x1f8] sm:$0xff]
    %v155 = vld [vmem:[#allocation6 + $0x200] sm:$0xff]
    %v156 = vld [vmem:[#allocation6 + $0x208] sm:$0xff]
    %v157 = vld [vmem:[#allocation6 + $0x210] sm:$0xff]
    %v158 = vld [vmem:[#allocation6 + $0x218] sm:$0xff]
    %v159 = vld [vmem:[#allocation6 + $0x220] sm:$0xff]
    %v160 = vld [vmem:[#allocation6 + $0x228] sm:$0xff]
    %v161 = vld [vmem:[#allocation6 + $0x230] sm:$0xff]
    %v162 = vld [vmem:[#allocation6 + $0x238] sm:$0xff]
    %v163 = vld [vmem:[#allocation6 + $0x240] sm:$0xff]
    %v164 = vld [vmem:[#allocation6 + $0x248] sm:$0xff]
    %v165 = vld [vmem:[#allocation6 + $0x250] sm:$0xff]
    %v166 = vld [vmem:[#allocation6 + $0x258] sm:$0xff]
    %v167 = vld [vmem:[#allocation6 + $0x260] sm:$0xff]
    %v168 = vld [vmem:[#allocation6 + $0x268] sm:$0xff]
    %v169 = vld [vmem:[#allocation6 + $0x270] sm:$0xff]
    %v170 = vld [vmem:[#allocation6 + $0x278] sm:$0xff]
    %v171 = vld [vmem:[#allocation6 + $0x280] sm:$0xff]
    %v172 = vld [vmem:[#allocation6 + $0x288] sm:$0xff]
    %v173 = vld [vmem:[#allocation6 + $0x290] sm:$0xff]
    %v174 = vld [vmem:[#allocation6 + $0x298] sm:$0xff]
    %v175 = vld [vmem:[#allocation6 + $0x2a0] sm:$0xff]
    %v176 = vld [vmem:[#allocation6 + $0x2a8] sm:$0xff]
    %v177 = vld [vmem:[#allocation6 + $0x2b0] sm:$0xff]
    %v178 = vld [vmem:[#allocation6 + $0x2b8] sm:$0xff]
    %v179 = vld [vmem:[#allocation6 + $0x2c0] sm:$0xff]
    %v180 = vld [vmem:[#allocation6 + $0x2c8] sm:$0xff]
    %v181 = vld [vmem:[#allocation6 + $0x2d0] sm:$0xff]
    %v182 = vld [vmem:[#allocation6 + $0x2d8] sm:$0xff]
    %v183 = vld [vmem:[#allocation6 + $0x2e0] sm:$0xff]
    %v184 = vld [vmem:[#allocation6 + $0x2e8] sm:$0xff]
    %v185 = vld [vmem:[#allocation6 + $0x2f0] sm:$0xff]
    %v186 = vld [vmem:[#allocation6 + $0x2f8] sm:$0xff]
    %v187 = vld [vmem:[#allocation6 + $0x300] sm:$0xff]
    %v188 = vld [vmem:[#allocation6 + $0x308] sm:$0xff]
    %v189 = vld [vmem:[%s2] sm:$0x3]
    %v191 = vlaneseq
    %v192 = vshrl.u32 %v191, 7
    %v193 = vsub.s32 0, %v192
    %v194 = vrot.slane %v189, %v193
    %v195 = vlaneseq
    %v196 = vshrl.u32 %v195, 7
    %v197 = vsub.s32 1, %v196
    %v198 = vrot.slane %v189, %v197
    %v299 = vunpack.c.l.b16 %v91
    %v300 = vunpack.c.h.b16 %v91
    %v301 = vunpack.c.l.b16 %v92
    %v302 = vunpack.c.h.b16 %v92
    %v303 = vunpack.c.l.b16 %v93
    %v304 = vunpack.c.h.b16 %v93
    %v305 = vunpack.c.l.b16 %v94
    %v306 = vunpack.c.h.b16 %v94
    %v307 = vunpack.c.l.b16 %v95
    %v308 = vunpack.c.h.b16 %v95
    %v309 = vunpack.c.l.b16 %v96
    %v310 = vunpack.c.h.b16 %v96
    %v311 = vunpack.c.l.b16 %v97
    %v312 = vunpack.c.h.b16 %v97
    %v313 = vunpack.c.l.b16 %v98
    %v314 = vunpack.c.h.b16 %v98
    %v315 = vunpack.c.l.b16 %v99
    %v316 = vunpack.c.h.b16 %v99
    %v317 = vunpack.c.l.b16 %v100
    %v318 = vunpack.c.h.b16 %v100
    %v319 = vunpack.c.l.b16 %v101
    %v320 = vunpack.c.h.b16 %v101
    %v321 = vunpack.c.l.b16 %v102
    %v322 = vunpack.c.h.b16 %v102
    %v323 = vunpack.c.l.b16 %v103
    %v324 = vunpack.c.h.b16 %v103
    %v325 = vunpack.c.l.b16 %v104
    %v326 = vunpack.c.h.b16 %v104
    %v327 = vunpack.c.l.b16 %v105
    %v328 = vunpack.c.h.b16 %v105
    %v329 = vunpack.c.l.b16 %v106
    %v330 = vunpack.c.h.b16 %v106
    %v331 = vunpack.c.l.b16 %v107
    %v332 = vunpack.c.h.b16 %v107
    %v333 = vunpack.c.l.b16 %v108
    %v334 = vunpack.c.h.b16 %v108
    %v335 = vunpack.c.l.b16 %v109
    %v336 = vunpack.c.h.b16 %v109
    %v337 = vunpack.c.l.b16 %v110
    %v338 = vunpack.c.h.b16 %v110
    %v339 = vunpack.c.l.b16 %v111
    %v340 = vunpack.c.h.b16 %v111
    %v341 = vunpack.c.l.b16 %v112
    %v342 = vunpack.c.h.b16 %v112
    %v343 = vunpack.c.l.b16 %v113
    %v344 = vunpack.c.h.b16 %v113
    %v345 = vunpack.c.l.b16 %v114
    %v346 = vunpack.c.h.b16 %v114
    %v347 = vunpack.c.l.b16 %v115
    %v348 = vunpack.c.h.b16 %v115
    %v349 = vunpack.c.l.b16 %v116
    %v350 = vunpack.c.h.b16 %v116
    %v351 = vunpack.c.l.b16 %v117
    %v352 = vunpack.c.h.b16 %v117
    %v353 = vunpack.c.l.b16 %v118
    %v354 = vunpack.c.h.b16 %v118
    %v355 = vunpack.c.l.b16 %v119
    %v356 = vunpack.c.h.b16 %v119
    %v357 = vunpack.c.l.b16 %v120
    %v358 = vunpack.c.h.b16 %v120
    %v359 = vunpack.c.l.b16 %v121
    %v360 = vunpack.c.h.b16 %v121
    %v361 = vunpack.c.l.b16 %v122
    %v362 = vunpack.c.h.b16 %v122
    %v363 = vunpack.c.l.b16 %v123
    %v364 = vunpack.c.h.b16 %v123
    %v365 = vunpack.c.l.b16 %v124
    %v366 = vunpack.c.h.b16 %v124
    %v367 = vunpack.c.l.b16 %v125
    %v368 = vunpack.c.h.b16 %v125
    %v369 = vunpack.c.l.b16 %v126
    %v370 = vunpack.c.h.b16 %v126
    %v371 = vunpack.c.l.b16 %v127
    %v372 = vunpack.c.h.b16 %v127
    %v373 = vunpack.c.l.b16 %v128
    %v374 = vunpack.c.h.b16 %v128
    %v375 = vunpack.c.l.b16 %v129
    %v376 = vunpack.c.h.b16 %v129
    %v377 = vunpack.c.l.b16 %v130
    %v378 = vunpack.c.h.b16 %v130
    %v379 = vunpack.c.l.b16 %v131
    %v380 = vunpack.c.h.b16 %v131
    %v381 = vunpack.c.l.b16 %v132
    %v382 = vunpack.c.h.b16 %v132
    %v383 = vunpack.c.l.b16 %v133
    %v384 = vunpack.c.h.b16 %v133
    %v385 = vunpack.c.l.b16 %v134
    %v386 = vunpack.c.h.b16 %v134
    %v387 = vunpack.c.l.b16 %v135
    %v388 = vunpack.c.h.b16 %v135
    %v389 = vunpack.c.l.b16 %v136
    %v390 = vunpack.c.h.b16 %v136
    %v391 = vunpack.c.l.b16 %v137
    %v392 = vunpack.c.h.b16 %v137
    %v393 = vunpack.c.l.b16 %v138
    %v394 = vunpack.c.h.b16 %v138
    %v395 = vunpack.c.l.b16 %v139
    %v396 = vunpack.c.h.b16 %v139
    %v397 = vunpack.c.l.b16 %v140
    %v398 = vunpack.c.h.b16 %v140
    %v399 = vunpack.c.l.b16 %v141
    %v400 = vunpack.c.h.b16 %v141
    %v401 = vunpack.c.l.b16 %v142
    %v402 = vunpack.c.h.b16 %v142
    %v403 = vunpack.c.l.b16 %v143
    %v404 = vunpack.c.h.b16 %v143
    %v405 = vunpack.c.l.b16 %v144
    %v406 = vunpack.c.h.b16 %v144
    %v407 = vunpack.c.l.b16 %v145
    %v408 = vunpack.c.h.b16 %v145
    %v409 = vunpack.c.l.b16 %v146
    %v410 = vunpack.c.h.b16 %v146
    %v411 = vunpack.c.l.b16 %v147
    %v412 = vunpack.c.h.b16 %v147
    %v413 = vunpack.c.l.b16 %v148
    %v414 = vunpack.c.h.b16 %v148
    %v415 = vunpack.c.l.b16 %v149
    %v416 = vunpack.c.h.b16 %v149
    %v417 = vunpack.c.l.b16 %v150
    %v418 = vunpack.c.h.b16 %v150
    %v419 = vunpack.c.l.b16 %v151
    %v420 = vunpack.c.h.b16 %v151
    %v421 = vunpack.c.l.b16 %v152
    %v422 = vunpack.c.h.b16 %v152
    %v423 = vunpack.c.l.b16 %v153
    %v424 = vunpack.c.h.b16 %v153
    %v425 = vunpack.c.l.b16 %v154
    %v426 = vunpack.c.h.b16 %v154
    %v427 = vunpack.c.l.b16 %v155
    %v428 = vunpack.c.h.b16 %v155
    %v429 = vunpack.c.l.b16 %v156
    %v430 = vunpack.c.h.b16 %v156
    %v431 = vunpack.c.l.b16 %v157
    %v432 = vunpack.c.h.b16 %v157
    %v433 = vunpack.c.l.b16 %v158
    %v434 = vunpack.c.h.b16 %v158
    %v435 = vunpack.c.l.b16 %v159
    %v436 = vunpack.c.h.b16 %v159
    %v437 = vunpack.c.l.b16 %v160
    %v438 = vunpack.c.h.b16 %v160
    %v439 = vunpack.c.l.b16 %v161
    %v440 = vunpack.c.h.b16 %v161
    %v441 = vunpack.c.l.b16 %v162
    %v442 = vunpack.c.h.b16 %v162
    %v443 = vunpack.c.l.b16 %v163
    %v444 = vunpack.c.h.b16 %v163
    %v445 = vunpack.c.l.b16 %v164
    %v446 = vunpack.c.h.b16 %v164
    %v447 = vunpack.c.l.b16 %v165
    %v448 = vunpack.c.h.b16 %v165
    %v449 = vunpack.c.l.b16 %v166
    %v450 = vunpack.c.h.b16 %v166
    %v451 = vunpack.c.l.b16 %v167
    %v452 = vunpack.c.h.b16 %v167
    %v453 = vunpack.c.l.b16 %v168
    %v454 = vunpack.c.h.b16 %v168
    %v455 = vunpack.c.l.b16 %v169
    %v456 = vunpack.c.h.b16 %v169
    %v457 = vunpack.c.l.b16 %v170
    %v458 = vunpack.c.h.b16 %v170
    %v459 = vunpack.c.l.b16 %v171
    %v460 = vunpack.c.h.b16 %v171
    %v461 = vunpack.c.l.b16 %v172
    %v462 = vunpack.c.h.b16 %v172
    %v463 = vunpack.c.l.b16 %v173
    %v464 = vunpack.c.h.b16 %v173
    %v465 = vunpack.c.l.b16 %v174
    %v466 = vunpack.c.h.b16 %v174
    %v467 = vunpack.c.l.b16 %v175
    %v468 = vunpack.c.h.b16 %v175
    %v469 = vunpack.c.l.b16 %v176
    %v470 = vunpack.c.h.b16 %v176
    %v471 = vunpack.c.l.b16 %v177
    %v472 = vunpack.c.h.b16 %v177
    %v473 = vunpack.c.l.b16 %v178
    %v474 = vunpack.c.h.b16 %v178
    %v475 = vunpack.c.l.b16 %v179
    %v476 = vunpack.c.h.b16 %v179
    %v477 = vunpack.c.l.b16 %v180
    %v478 = vunpack.c.h.b16 %v180
    %v479 = vunpack.c.l.b16 %v181
    %v480 = vunpack.c.h.b16 %v181
    %v481 = vunpack.c.l.b16 %v182
    %v482 = vunpack.c.h.b16 %v182
    %v483 = vunpack.c.l.b16 %v183
    %v484 = vunpack.c.h.b16 %v183
    %v485 = vunpack.c.l.b16 %v184
    %v486 = vunpack.c.h.b16 %v184
    %v487 = vunpack.c.l.b16 %v185
    %v488 = vunpack.c.h.b16 %v185
    %v489 = vunpack.c.l.b16 %v186
    %v490 = vunpack.c.h.b16 %v186
    %v491 = vunpack.c.l.b16 %v187
    %v492 = vunpack.c.h.b16 %v187
    %v493 = vunpack.c.l.b16 %v188
    %v494 = vunpack.c.h.b16 %v188
    %v495 = vpack.c.b16 %v301, %v299
    %v496 = vpack.c.b16 %v302, %v300
    %v497 = vpack.c.b16 %v305, %v303
    %v498 = vpack.c.b16 %v306, %v304
    %v499 = vpack.c.b16 %v309, %v307
    %v500 = vpack.c.b16 %v310, %v308
    %v501 = vpack.c.b16 %v313, %v311
    %v502 = vpack.c.b16 %v314, %v312
    %v503 = vpack.c.b16 %v317, %v315
    %v504 = vpack.c.b16 %v318, %v316
    %v505 = vpack.c.b16 %v321, %v319
    %v506 = vpack.c.b16 %v322, %v320
    %v507 = vpack.c.b16 %v325, %v323
    %v508 = vpack.c.b16 %v326, %v324
    %v509 = vpack.c.b16 %v329, %v327
    %v510 = vpack.c.b16 %v330, %v328
    %v511 = vpack.c.b16 %v333, %v331
    %v512 = vpack.c.b16 %v334, %v332
    %v513 = vpack.c.b16 %v337, %v335
    %v514 = vpack.c.b16 %v338, %v336
    %v515 = vpack.c.b16 %v341, %v339
    %v516 = vpack.c.b16 %v342, %v340
    %v517 = vpack.c.b16 %v345, %v343
    %v518 = vpack.c.b16 %v346, %v344
    %v519 = vpack.c.b16 %v349, %v347
    %v520 = vpack.c.b16 %v350, %v348
    %v521 = vpack.c.b16 %v353, %v351
    %v522 = vpack.c.b16 %v354, %v352
    %v523 = vpack.c.b16 %v357, %v355
    %v524 = vpack.c.b16 %v358, %v356
    %v525 = vpack.c.b16 %v361, %v359
    %v526 = vpack.c.b16 %v362, %v360
    %v527 = vpack.c.b16 %v365, %v363
    %v528 = vpack.c.b16 %v366, %v364
    %v529 = vpack.c.b16 %v369, %v367
    %v530 = vpack.c.b16 %v370, %v368
    %v531 = vpack.c.b16 %v373, %v371
    %v532 = vpack.c.b16 %v374, %v372
    %v533 = vpack.c.b16 %v377, %v375
    %v534 = vpack.c.b16 %v378, %v376
    %v535 = vpack.c.b16 %v381, %v379
    %v536 = vpack.c.b16 %v382, %v380
    %v537 = vpack.c.b16 %v385, %v383
    %v538 = vpack.c.b16 %v386, %v384
    %v539 = vpack.c.b16 %v389, %v387
    %v540 = vpack.c.b16 %v390, %v388
    %v541 = vpack.c.b16 %v393, %v391
    %v542 = vpack.c.b16 %v394, %v392
    %v543 = vpack.c.b16 %v397, %v395
    %v544 = vpack.c.b16 %v398, %v396
    %v545 = vpack.c.b16 %v401, %v399
    %v546 = vpack.c.b16 %v402, %v400
    %v547 = vpack.c.b16 %v405, %v403
    %v548 = vpack.c.b16 %v406, %v404
    %v549 = vpack.c.b16 %v409, %v407
    %v550 = vpack.c.b16 %v410, %v408
    %v551 = vpack.c.b16 %v413, %v411
    %v552 = vpack.c.b16 %v414, %v412
    %v553 = vpack.c.b16 %v417, %v415
    %v554 = vpack.c.b16 %v418, %v416
    %v555 = vpack.c.b16 %v421, %v419
    %v556 = vpack.c.b16 %v422, %v420
    %v557 = vpack.c.b16 %v425, %v423
    %v558 = vpack.c.b16 %v426, %v424
    %v559 = vpack.c.b16 %v429, %v427
    %v560 = vpack.c.b16 %v430, %v428
    %v561 = vpack.c.b16 %v433, %v431
    %v562 = vpack.c.b16 %v434, %v432
    %v563 = vpack.c.b16 %v437, %v435
    %v564 = vpack.c.b16 %v438, %v436
    %v565 = vpack.c.b16 %v441, %v439
    %v566 = vpack.c.b16 %v442, %v440
    %v567 = vpack.c.b16 %v445, %v443
    %v568 = vpack.c.b16 %v446, %v444
    %v569 = vpack.c.b16 %v449, %v447
    %v570 = vpack.c.b16 %v450, %v448
    %v571 = vpack.c.b16 %v453, %v451
    %v572 = vpack.c.b16 %v454, %v452
    %v573 = vpack.c.b16 %v457, %v455
    %v574 = vpack.c.b16 %v458, %v456
    %v575 = vpack.c.b16 %v461, %v459
    %v576 = vpack.c.b16 %v462, %v460
    %v577 = vpack.c.b16 %v465, %v463
    %v578 = vpack.c.b16 %v466, %v464
    %v579 = vpack.c.b16 %v469, %v467
    %v580 = vpack.c.b16 %v470, %v468
    %v581 = vpack.c.b16 %v473, %v471
    %v582 = vpack.c.b16 %v474, %v472
    %v583 = vpack.c.b16 %v477, %v475
    %v584 = vpack.c.b16 %v478, %v476
    %v585 = vpack.c.b16 %v481, %v479
    %v586 = vpack.c.b16 %v482, %v480
    %v587 = vpack.c.b16 %v485, %v483
    %v588 = vpack.c.b16 %v486, %v484
    %v589 = vpack.c.b16 %v489, %v487
    %v590 = vpack.c.b16 %v490, %v488
    %v591 = vpack.c.b16 %v493, %v491
    %v592 = vpack.c.b16 %v494, %v492
    %vm691 = vcmask 130048
    %v693 = vsel %vm691, %v90, 0
    %695 = vmatprep.subr.bf16.mxu0 %v496
    %696 = vmatpush1.bf16.msra.mxu0 %v495
    %697 = vmatprep.subr.bf16.mxu0 %v498
    %698 = vmatpush1.bf16.msra.mxu0 %v497
    %699 = vmatprep.subr.bf16.mxu0 %v500
    %700 = vmatpush1.bf16.msra.mxu0 %v499
    %701 = vmatprep.subr.bf16.mxu0 %v502
    %702 = vmatpush1.bf16.msra.mxu0 %v501
    %703 = vmatprep.subr.bf16.mxu0 %v504
    %704 = vmatpush1.bf16.msra.mxu0 %v503
    %705 = vmatprep.subr.bf16.mxu0 %v506
    %706 = vmatpush1.bf16.msra.mxu0 %v505
    %707 = vmatprep.subr.bf16.mxu0 %v508
    %708 = vmatpush1.bf16.msra.mxu0 %v507
    %709 = vmatprep.subr.bf16.mxu0 %v510
    %710 = vmatpush1.bf16.msra.mxu0 %v509
    %711 = vmatprep.subr.bf16.mxu0 %v512
    %712 = vmatpush1.bf16.msra.mxu0 %v511
    %713 = vmatprep.subr.bf16.mxu0 %v514
    %714 = vmatpush1.bf16.msra.mxu0 %v513
    %715 = vmatprep.subr.bf16.mxu0 %v516
    %716 = vmatpush1.bf16.msra.mxu0 %v515
    %717 = vmatprep.subr.bf16.mxu0 %v518
    %718 = vmatpush1.bf16.msra.mxu0 %v517
    %719 = vmatprep.subr.bf16.mxu0 %v520
    %720 = vmatpush1.bf16.msra.mxu0 %v519
    %721 = vmatprep.subr.bf16.mxu0 %v522
    %722 = vmatpush1.bf16.msra.mxu0 %v521
    %723 = vmatprep.subr.bf16.mxu0 %v524
    %724 = vmatpush1.bf16.msra.mxu0 %v523
    %725 = vmatprep.subr.bf16.mxu0 %v526
    %726 = vmatpush1.bf16.msra.mxu0 %v525
    %727 = vmatprep.mubr.bf16.mxu0 %v85
    %728 = vmatmul.mubr.bf16.gmra.mrb[0].mxu0 %v84
    %v729 = vpop.f32.mrb[0].mxu0
    %v730 = vadd.f32 %v194, %v729
    %v731 = vpop.f32.mrb[0].mxu0
    %v732 = vadd.f32 %v198, %v731
    %v733 = vpop.f32.mrb[0].mxu0
    %v734 = vadd.f32 %v194, %v733
    %v735 = vpop.f32.mrb[0].mxu0
    %v736 = vadd.f32 %v198, %v735
    %737 = vdwg.mxu0
    %738 = vmatprep.subr.bf16.mxu0 %v528
    %739 = vmatpush1.bf16.msra.mxu0 %v527
    %740 = vmatprep.subr.bf16.mxu0 %v530
    %741 = vmatpush1.bf16.msra.mxu0 %v529
    %742 = vmatprep.subr.bf16.mxu0 %v532
    %743 = vmatpush1.bf16.msra.mxu0 %v531
    %744 = vmatprep.subr.bf16.mxu0 %v534
    %745 = vmatpush1.bf16.msra.mxu0 %v533
    %746 = vmatprep.subr.bf16.mxu0 %v536
    %747 = vmatpush1.bf16.msra.mxu0 %v535
    %748 = vmatprep.subr.bf16.mxu0 %v538
    %749 = vmatpush1.bf16.msra.mxu0 %v537
    %750 = vmatprep.subr.bf16.mxu0 %v540
    %751 = vmatpush1.bf16.msra.mxu0 %v539
    %752 = vmatprep.subr.bf16.mxu0 %v542
    %753 = vmatpush1.bf16.msra.mxu0 %v541
    %754 = vmatprep.subr.bf16.mxu0 %v544
    %755 = vmatpush1.bf16.msra.mxu0 %v543
    %756 = vmatprep.subr.bf16.mxu0 %v546
    %757 = vmatpush1.bf16.msra.mxu0 %v545
    %758 = vmatprep.subr.bf16.mxu0 %v548
    %759 = vmatpush1.bf16.msra.mxu0 %v547
    %760 = vmatprep.subr.bf16.mxu0 %v550
    %761 = vmatpush1.bf16.msra.mxu0 %v549
    %762 = vmatprep.subr.bf16.mxu0 %v552
    %763 = vmatpush1.bf16.msra.mxu0 %v551
    %764 = vmatprep.subr.bf16.mxu0 %v554
    %765 = vmatpush1.bf16.msra.mxu0 %v553
    %766 = vmatprep.subr.bf16.mxu0 %v556
    %767 = vmatpush1.bf16.msra.mxu0 %v555
    %768 = vmatprep.subr.bf16.mxu0 %v558
    %769 = vmatpush1.bf16.msra.mxu0 %v557
    %770 = vmatprep.mubr.bf16.mxu0 %v87
    %771 = vmatmul.mubr.bf16.gmra.mrb[0].mxu0 %v86
    %v772 = vpop.f32.mrb[0].mxu0
    %v773 = vadd.f32 %v730, %v772
    %v774 = vpop.f32.mrb[0].mxu0
    %v775 = vadd.f32 %v732, %v774
    %v776 = vpop.f32.mrb[0].mxu0
    %v777 = vadd.f32 %v734, %v776
    %v778 = vpop.f32.mrb[0].mxu0
    %v779 = vadd.f32 %v736, %v778
    %780 = vdwg.mxu0
    %781 = vmatprep.subr.bf16.mxu0 %v560
    %782 = vmatpush1.bf16.msra.mxu0 %v559
    %783 = vmatprep.subr.bf16.mxu0 %v562
    %784 = vmatpush1.bf16.msra.mxu0 %v561
    %785 = vmatprep.subr.bf16.mxu0 %v564
    %786 = vmatpush1.bf16.msra.mxu0 %v563
    %787 = vmatprep.subr.bf16.mxu0 %v566
    %788 = vmatpush1.bf16.msra.mxu0 %v565
    %789 = vmatprep.subr.bf16.mxu0 %v568
    %790 = vmatpush1.bf16.msra.mxu0 %v567
    %791 = vmatprep.subr.bf16.mxu0 %v570
    %792 = vmatpush1.bf16.msra.mxu0 %v569
    %793 = vmatprep.subr.bf16.mxu0 %v572
    %794 = vmatpush1.bf16.msra.mxu0 %v571
    %795 = vmatprep.subr.bf16.mxu0 %v574
    %796 = vmatpush1.bf16.msra.mxu0 %v573
    %797 = vmatprep.subr.bf16.mxu0 %v576
    %798 = vmatpush1.bf16.msra.mxu0 %v575
    %799 = vmatprep.subr.bf16.mxu0 %v578
    %800 = vmatpush1.bf16.msra.mxu0 %v577
    %801 = vmatprep.subr.bf16.mxu0 %v580
    %802 = vmatpush1.bf16.msra.mxu0 %v579
    %803 = vmatprep.subr.bf16.mxu0 %v582
    %804 = vmatpush1.bf16.msra.mxu0 %v581
    %805 = vmatprep.subr.bf16.mxu0 %v584
    %806 = vmatpush1.bf16.msra.mxu0 %v583
    %807 = vmatprep.subr.bf16.mxu0 %v586
    %808 = vmatpush1.bf16.msra.mxu0 %v585
    %809 = vmatprep.subr.bf16.mxu0 %v588
    %810 = vmatpush1.bf16.msra.mxu0 %v587
    %811 = vmatprep.subr.bf16.mxu0 %v590
    %812 = vmatpush1.bf16.msra.mxu0 %v589
    %813 = vmatprep.mubr.bf16.mxu0 %v89
    %814 = vmatmul.mubr.bf16.gmra.mrb[0].mxu0 %v88
    %v815 = vpop.f32.mrb[0].mxu0
    %v816 = vadd.f32 %v773, %v815
    %v817 = vpop.f32.mrb[0].mxu0
    %v818 = vadd.f32 %v775, %v817
    %v819 = vpop.f32.mrb[0].mxu0
    %v820 = vadd.f32 %v777, %v819
    %v821 = vpop.f32.mrb[0].mxu0
    %v822 = vadd.f32 %v779, %v821
    %823 = vdwg.mxu0
    %824 = vmatprep.subr.bf16.mxu0 %v592
    %825 = vmatpush1.bf16.msra.mxu0 %v591
    %826 = vmatprep.subr.bf16.mxu0 0
    %827 = vmatpush1.bf16.msra.mxu0 0
    %828 = vmatprep.subr.bf16.mxu0 0
    %829 = vmatpush1.bf16.msra.mxu0 0
    %830 = vmatprep.subr.bf16.mxu0 0
    %831 = vmatpush1.bf16.msra.mxu0 0
    %832 = vmatprep.subr.bf16.mxu0 0
    %833 = vmatpush1.bf16.msra.mxu0 0
    %834 = vmatprep.subr.bf16.mxu0 0
    %835 = vmatpush1.bf16.msra.mxu0 0
    %836 = vmatprep.subr.bf16.mxu0 0
    %837 = vmatpush1.bf16.msra.mxu0 0
    %838 = vmatprep.subr.bf16.mxu0 0
    %839 = vmatpush1.bf16.msra.mxu0 0
    %840 = vmatprep.subr.bf16.mxu0 0
    %841 = vmatpush1.bf16.msra.mxu0 0
    %842 = vmatprep.subr.bf16.mxu0 0
    %843 = vmatpush1.bf16.msra.mxu0 0
    %844 = vmatprep.subr.bf16.mxu0 0
    %845 = vmatpush1.bf16.msra.mxu0 0
    %846 = vmatprep.subr.bf16.mxu0 0
    %847 = vmatpush1.bf16.msra.mxu0 0
    %848 = vmatprep.subr.bf16.mxu0 0
    %849 = vmatpush1.bf16.msra.mxu0 0
    %850 = vmatprep.subr.bf16.mxu0 0
    %851 = vmatpush1.bf16.msra.mxu0 0
    %852 = vmatprep.subr.bf16.mxu0 0
    %853 = vmatpush1.bf16.msra.mxu0 0
    %854 = vmatprep.subr.bf16.mxu0 0
    %855 = vmatpush1.bf16.msra.mxu0 0
    %856 = vmatprep.mubr.bf16.mxu0 0
    %857 = vmatmul.mubr.bf16.gmra.mrb[0].mxu0 %v693
    %v858 = vpop.f32.mrb[0].mxu0
    %v859 = vadd.f32 %v816, %v858
    %v860 = vpop.f32.mrb[0].mxu0
    %v861 = vadd.f32 %v818, %v860
    %v862 = vpop.f32.mrb[0].mxu0
    %v863 = vadd.f32 %v820, %v862
    %v864 = vpop.f32.mrb[0].mxu0
    %v865 = vadd.f32 %v822, %v864
    %866 = vdwg.mxu0
    %v867 = vmul.f32 %v859, 0.01
    %v868 = vmul.f32 %v861, 0.01
    %v869 = vmul.f32 %v863, 0.01
    %v870 = vmul.f32 %v865, 0.01
    %v871 = vmax.f32 %v859, %v867
    %v872 = vmax.f32 %v861, %v868
    %v873 = vmax.f32 %v863, %v869
    %v874 = vmax.f32 %v865, %v870
    %v875 = vpack.c.bf16 %v873, %v871
    %v876 = vpack.c.bf16 %v874, %v872
    %v877 = vld [vmem:[#allocation8] sm:$0xff]
    %v878 = vld [vmem:[#allocation8 + $0x8] sm:$0xff]
    %v879 = vld [vmem:[#allocation8 + $0x10] sm:$0xff]
    %v880 = vld [vmem:[#allocation8 + $0x18] sm:$0xff]
    %v881 = vld [vmem:[#allocation8 + $0x20] sm:$0xff]
    %v882 = vld [vmem:[#allocation8 + $0x28] sm:$0xff]
    %v883 = vld [vmem:[#allocation8 + $0x30] sm:$0xff]
    %v884 = vld [vmem:[#allocation8 + $0x38] sm:$0xff]
    %v885 = vld [vmem:[#allocation8 + $0x40] sm:$0xff]
    %v886 = vld [vmem:[#allocation8 + $0x48] sm:$0xff]
    %v887 = vld [vmem:[#allocation8 + $0x50] sm:$0xff]
    %v888 = vld [vmem:[#allocation8 + $0x58] sm:$0xff]
    %v889 = vld [vmem:[#allocation8 + $0x60] sm:$0xff]
    %v890 = vld [vmem:[#allocation8 + $0x68] sm:$0xff]
    %v891 = vld [vmem:[#allocation8 + $0x70] sm:$0xff]
    %v892 = vld [vmem:[#allocation8 + $0x78] sm:$0xff]
    %v893 = vld [vmem:[#allocation8 + $0x80] sm:$0xff]
    %v894 = vld [vmem:[#allocation8 + $0x88] sm:$0xff]
    %v895 = vld [vmem:[#allocation8 + $0x90] sm:$0xff]
    %v896 = vld [vmem:[#allocation8 + $0x98] sm:$0xff]
    %v897 = vld [vmem:[#allocation8 + $0xa0] sm:$0xff]
    %v898 = vld [vmem:[#allocation8 + $0xa8] sm:$0xff]
    %v899 = vld [vmem:[#allocation8 + $0xb0] sm:$0xff]
    %v900 = vld [vmem:[#allocation8 + $0xb8] sm:$0xff]
    %v901 = vld [vmem:[#allocation8 + $0xc0] sm:$0xff]
    %v902 = vld [vmem:[#allocation8 + $0xc8] sm:$0xff]
    %v903 = vld [vmem:[#allocation8 + $0xd0] sm:$0xff]
    %v904 = vld [vmem:[#allocation8 + $0xd8] sm:$0xff]
    %v905 = vld [vmem:[#allocation8 + $0xe0] sm:$0xff]
    %v906 = vld [vmem:[#allocation8 + $0xe8] sm:$0xff]
    %v907 = vld [vmem:[#allocation8 + $0xf0] sm:$0xff]
    %v908 = vld [vmem:[#allocation8 + $0xf8] sm:$0xff]
    %v909 = vld [vmem:[%s4] sm:$0x3]
    %v911 = vlaneseq
    %v912 = vshrl.u32 %v911, 7
    %v913 = vsub.s32 0, %v912
    %v914 = vrot.slane %v909, %v913
    %v915 = vlaneseq
    %v916 = vshrl.u32 %v915, 7
    %v917 = vsub.s32 1, %v916
    %v918 = vrot.slane %v909, %v917
    %v953 = vunpack.c.l.b16 %v877
    %v954 = vunpack.c.h.b16 %v877
    %v955 = vunpack.c.l.b16 %v878
    %v956 = vunpack.c.h.b16 %v878
    %v957 = vunpack.c.l.b16 %v879
    %v958 = vunpack.c.h.b16 %v879
    %v959 = vunpack.c.l.b16 %v880
    %v960 = vunpack.c.h.b16 %v880
    %v961 = vunpack.c.l.b16 %v881
    %v962 = vunpack.c.h.b16 %v881
    %v963 = vunpack.c.l.b16 %v882
    %v964 = vunpack.c.h.b16 %v882
    %v965 = vunpack.c.l.b16 %v883
    %v966 = vunpack.c.h.b16 %v883
    %v967 = vunpack.c.l.b16 %v884
    %v968 = vunpack.c.h.b16 %v884
    %v969 = vunpack.c.l.b16 %v885
    %v970 = vunpack.c.h.b16 %v885
    %v971 = vunpack.c.l.b16 %v886
    %v972 = vunpack.c.h.b16 %v886
    %v973 = vunpack.c.l.b16 %v887
    %v974 = vunpack.c.h.b16 %v887
    %v975 = vunpack.c.l.b16 %v888
    %v976 = vunpack.c.h.b16 %v888
    %v977 = vunpack.c.l.b16 %v889
    %v978 = vunpack.c.h.b16 %v889
    %v979 = vunpack.c.l.b16 %v890
    %v980 = vunpack.c.h.b16 %v890
    %v981 = vunpack.c.l.b16 %v891
    %v982 = vunpack.c.h.b16 %v891
    %v983 = vunpack.c.l.b16 %v892
    %v984 = vunpack.c.h.b16 %v892
    %v985 = vunpack.c.l.b16 %v893
    %v986 = vunpack.c.h.b16 %v893
    %v987 = vunpack.c.l.b16 %v894
    %v988 = vunpack.c.h.b16 %v894
    %v989 = vunpack.c.l.b16 %v895
    %v990 = vunpack.c.h.b16 %v895
    %v991 = vunpack.c.l.b16 %v896
    %v992 = vunpack.c.h.b16 %v896
    %v993 = vunpack.c.l.b16 %v897
    %v994 = vunpack.c.h.b16 %v897
    %v995 = vunpack.c.l.b16 %v898
    %v996 = vunpack.c.h.b16 %v898
    %v997 = vunpack.c.l.b16 %v899
    %v998 = vunpack.c.h.b16 %v899
    %v999 = vunpack.c.l.b16 %v900
    %v1000 = vunpack.c.h.b16 %v900
    %v1001 = vunpack.c.l.b16 %v901
    %v1002 = vunpack.c.h.b16 %v901
    %v1003 = vunpack.c.l.b16 %v902
    %v1004 = vunpack.c.h.b16 %v902
    %v1005 = vunpack.c.l.b16 %v903
    %v1006 = vunpack.c.h.b16 %v903
    %v1007 = vunpack.c.l.b16 %v904
    %v1008 = vunpack.c.h.b16 %v904
    %v1009 = vunpack.c.l.b16 %v905
    %v1010 = vunpack.c.h.b16 %v905
    %v1011 = vunpack.c.l.b16 %v906
    %v1012 = vunpack.c.h.b16 %v906
    %v1013 = vunpack.c.l.b16 %v907
    %v1014 = vunpack.c.h.b16 %v907
    %v1015 = vunpack.c.l.b16 %v908
    %v1016 = vunpack.c.h.b16 %v908
    %v1017 = vpack.c.b16 %v955, %v953
    %v1018 = vpack.c.b16 %v956, %v954
    %v1019 = vpack.c.b16 %v959, %v957
    %v1020 = vpack.c.b16 %v960, %v958
    %v1021 = vpack.c.b16 %v963, %v961
    %v1022 = vpack.c.b16 %v964, %v962
    %v1023 = vpack.c.b16 %v967, %v965
    %v1024 = vpack.c.b16 %v968, %v966
    %v1025 = vpack.c.b16 %v971, %v969
    %v1026 = vpack.c.b16 %v972, %v970
    %v1027 = vpack.c.b16 %v975, %v973
    %v1028 = vpack.c.b16 %v976, %v974
    %v1029 = vpack.c.b16 %v979, %v977
    %v1030 = vpack.c.b16 %v980, %v978
    %v1031 = vpack.c.b16 %v983, %v981
    %v1032 = vpack.c.b16 %v984, %v982
    %v1033 = vpack.c.b16 %v987, %v985
    %v1034 = vpack.c.b16 %v988, %v986
    %v1035 = vpack.c.b16 %v991, %v989
    %v1036 = vpack.c.b16 %v992, %v990
    %v1037 = vpack.c.b16 %v995, %v993
    %v1038 = vpack.c.b16 %v996, %v994
    %v1039 = vpack.c.b16 %v999, %v997
    %v1040 = vpack.c.b16 %v1000, %v998
    %v1041 = vpack.c.b16 %v1003, %v1001
    %v1042 = vpack.c.b16 %v1004, %v1002
    %v1043 = vpack.c.b16 %v1007, %v1005
    %v1044 = vpack.c.b16 %v1008, %v1006
    %v1045 = vpack.c.b16 %v1011, %v1009
    %v1046 = vpack.c.b16 %v1012, %v1010
    %v1047 = vpack.c.b16 %v1015, %v1013
    %v1048 = vpack.c.b16 %v1016, %v1014
    %1081 = vmatprep.subr.bf16.mxu0 %v1018
    %1082 = vmatpush1.bf16.msra.mxu0 %v1017
    %1083 = vmatprep.subr.bf16.mxu0 %v1020
    %1084 = vmatpush1.bf16.msra.mxu0 %v1019
    %1085 = vmatprep.subr.bf16.mxu0 %v1022
    %1086 = vmatpush1.bf16.msra.mxu0 %v1021
    %1087 = vmatprep.subr.bf16.mxu0 %v1024
    %1088 = vmatpush1.bf16.msra.mxu0 %v1023
    %1089 = vmatprep.subr.bf16.mxu0 %v1026
    %1090 = vmatpush1.bf16.msra.mxu0 %v1025
    %1091 = vmatprep.subr.bf16.mxu0 %v1028
    %1092 = vmatpush1.bf16.msra.mxu0 %v1027
    %1093 = vmatprep.subr.bf16.mxu0 %v1030
    %1094 = vmatpush1.bf16.msra.mxu0 %v1029
    %1095 = vmatprep.subr.bf16.mxu0 %v1032
    %1096 = vmatpush1.bf16.msra.mxu0 %v1031
    %1097 = vmatprep.subr.bf16.mxu0 %v1034
    %1098 = vmatpush1.bf16.msra.mxu0 %v1033
    %1099 = vmatprep.subr.bf16.mxu0 %v1036
    %1100 = vmatpush1.bf16.msra.mxu0 %v1035
    %1101 = vmatprep.subr.bf16.mxu0 %v1038
    %1102 = vmatpush1.bf16.msra.mxu0 %v1037
    %1103 = vmatprep.subr.bf16.mxu0 %v1040
    %1104 = vmatpush1.bf16.msra.mxu0 %v1039
    %1105 = vmatprep.subr.bf16.mxu0 %v1042
    %1106 = vmatpush1.bf16.msra.mxu0 %v1041
    %1107 = vmatprep.subr.bf16.mxu0 %v1044
    %1108 = vmatpush1.bf16.msra.mxu0 %v1043
    %1109 = vmatprep.subr.bf16.mxu0 %v1046
    %1110 = vmatpush1.bf16.msra.mxu0 %v1045
    %1111 = vmatprep.subr.bf16.mxu0 %v1048
    %1112 = vmatpush1.bf16.msra.mxu0 %v1047
    %1113 = vmatprep.mubr.bf16.mxu0 %v876
    %1114 = vmatmul.mubr.bf16.gmra.mrb[0].mxu0 %v875
    %v1115 = vpop.f32.mrb[0].mxu0
    %v1116 = vadd.f32 %v914, %v1115
    %v1117 = vpop.f32.mrb[0].mxu0
    %v1118 = vadd.f32 %v918, %v1117
    %v1119 = vpop.f32.mrb[0].mxu0
    %v1120 = vadd.f32 %v914, %v1119
    %v1121 = vpop.f32.mrb[0].mxu0
    %v1122 = vadd.f32 %v918, %v1121
    %1123 = vdwg.mxu0
    %v1124 = vmul.f32 %v1116, 0.01
    %v1125 = vmul.f32 %v1118, 0.01
    %v1126 = vmul.f32 %v1120, 0.01
    %v1127 = vmul.f32 %v1122, 0.01
    %v1128 = vmax.f32 %v1116, %v1124
    %v1129 = vmax.f32 %v1118, %v1125
    %v1130 = vmax.f32 %v1120, %v1126
    %v1131 = vmax.f32 %v1122, %v1127
    %v1132 = vld [vmem:[%s5] sm:$0x3]
    %v1134 = vlaneseq
    %v1135 = vshrl.u32 %v1134, 7
    %v1136 = vsub.s32 0, %v1135
    %v1137 = vrot.slane %v1132, %v1136
    %v1138 = vlaneseq
    %v1139 = vshrl.u32 %v1138, 7
    %v1140 = vsub.s32 1, %v1139
    %v1141 = vrot.slane %v1132, %v1140
    %v1144 = vmul.f32 %v1128, %v1137
    %v1145 = vmul.f32 %v1129, %v1141
    %v1146 = vmul.f32 %v1130, %v1137
    %v1147 = vmul.f32 %v1131, %v1141
    %v1148 = vadd.f32 %v1144, %v1145
    %1149 = vadd.xlane.f32.xlu0 %v1148
    %v1150 = vpop.xlane.xlu0 %1149
    %v1151 = vadd.f32 %v1146, %v1147
    %1152 = vadd.xlane.f32.xlu0 %v1151
    %v1153 = vpop.xlane.xlu0 %1152
    %s1154 = sld [smem:[#allocation2]]
    %v1155 = vstv %s1154
    %v1156 = vadd.f32 %v1150, %v1155
    %v1157 = vadd.f32 %v1153, %v1155
    %v1160 = vlaneseq
    %v1161 = vand.u32 %v1160, 127
    %v1162 = vlaneseq
    %v1163 = vshrl.u32 %v1162, 7
    %v1164 = vsub.s32 %v1161, %v1163
    %v1165 = vrot.slane %v1156, %v1164
    %v1166 = vadd.s32 %v1161, 4294967288
    %v1167 = vlaneseq
    %v1168 = vshrl.u32 %v1167, 7
    %v1169 = vsub.s32 %v1166, %v1168
    %v1170 = vrot.slane %v1157, %v1169
    %vm1171 = vcmask 130112
    %v1172 = vsel %vm1171, %v1170, %v1165
    %vm1174 = vcmask 122880
    %1175 = vst.msk [vmem:[#allocation9] sm:$0x1] %vm1174, %v1172
    // Predicated region
    $region42: #{tpu_custom_call.1} parent=1 // pred_check
      _
    $region43: #{tpu_custom_call.1} parent=1 // pred_check_branch
      %1177 = sbr.rel (0) target = $region45
    $region44: #{tpu_custom_call.1} parent=1 // pred_region
      %s1179 = ssub.s32 16, 16
      %1180 = vsyncadd [#allocation5], %s1179
      %s1182 = sshll.u32 [#allocation9], 4
      %s1183 = int_to_ptr.vmem [resolvable:$true] %s1182
      %1185 = dma.vmem_to_hbm [thread:$0]  %s1183, 16, %s7, [#allocation5]
    $region45: #{tpu_custom_call.1} parent=1 // pred_fallthru
      _
    // Predicated region
    $region46: #{tpu_custom_call.1} parent=1 // pred_check
      _
    $region47: #{tpu_custom_call.1} parent=1 // pred_check_branch
      %1187 = sbr.rel (0) target = $region49
    $region48: #{tpu_custom_call.1} parent=1 // pred_region
      %1188 = dma.done [#allocation5], 16
    $region49: #{tpu_custom_call.1} parent=1 // pred_fallthru
      _
    %1189 = vsyncpa [#allocation4], 1
    %1190 = vsyncpa [#allocation7], 1
    %1191 = vsyncpa [#allocation5], 1

</llo_original>
